<compile_context>
chip_gen: v7x
topology: tpu7x:2x2x1
jax: 0.10.0
libtpu: 0.0.40
codegen_flags: <defaults>
</compile_context>

<pallas_src>
from functools import partial

import jax
import jax.numpy as jnp
import numpy as np
from jax.experimental import pallas as pl
from jax.experimental.pallas import tpu as pltpu


def _adv_loss_kernel(idx_ref, scm_ref, post_ref, out_ref, *,
                     lambda_1, lambda_2, h, w, n):
    # idx_ref : SMEM int32 (2, n)  -> [row of channel-0 ; grid-x lane index]
    # scm_ref : SMEM f32   (3, n)  -> [sin ; cos ; valid-mask]
    # post_ref: VMEM f32   (B*HEADS*2*H, W) prediction map
    lane = jax.lax.broadcasted_iota(jnp.int32, (1, w), 1)  # hoisted out of loop

    def body(i, acc):
        row0 = idx_ref[0, i]           # row holding predicted_adv_1 for this slot
        x = idx_ref[1, i]              # lane (grid x) within that row
        s = scm_ref[0, i]
        c = scm_ref[1, i]
        m = scm_ref[2, i]              # 1.0 iff annotation has a rotation
        r0 = post_ref[pl.ds(row0, 1), :]        # (1, w) predicted_adv_1 row
        r1 = post_ref[pl.ds(row0 + h, 1), :]    # (1, w) predicted_adv_2 row (ch stride = H)
        p1 = r0 * s + r1 * c                    # projection_1 (lane-wise)
        p2 = r0 * c - r1 * s                    # projection_2
        d1 = p1 - 1.0
        # Only the lane == x contributes; lambdas are compile-time constants.
        return acc + jnp.where(lane == x,
                               m * (lambda_1 * d1 * d1 + lambda_2 * p2 * p2),
                               0.0)

    acc = jax.lax.fori_loop(0, n, body, jnp.zeros((1, w), jnp.float32),
                            unroll=(n <= 32))
    out_ref[0, 0] = jnp.sum(acc)


def adv_loss(post_activation_sincos, rotation, has_rotation, object_idxs,
             img_idxs, head_idxs, grid_y_idxs, grid_x_idxs,
             eccentricity: float = 3.0):
    """Pallas-backed equivalent of ADVLoss.forward.

    Invalid assignments (has_rotation == False) are masked to zero inside the
    kernel, matching the PyTorch `extract_bitmap` + reduce path.
    """
    assert eccentricity >= 1.0
    lambda_1 = 2.0 / (1.0 + eccentricity)
    lambda_2 = 2.0 - lambda_1

    B, HEADS, two, H, W = post_activation_sincos.shape
    assert two == 2
    n = int(object_idxs.shape[0])
    if n == 0:
        return jnp.float32(0.0)

    # ---- prediction map: contiguous (free) reshape, gathered in-kernel ------
    post2d = post_activation_sincos.astype(jnp.float32).reshape(B * HEADS * 2 * H, W)

    # ---- tiny O(N) per-assignment scalar tables (one small XLA prep fusion) --
    img = img_idxs.astype(jnp.int32)
    head = head_idxs.astype(jnp.int32)
    gy = grid_y_idxs.astype(jnp.int32)
    gx = grid_x_idxs.astype(jnp.int32)
    row0 = ((img * HEADS + head) * 2) * H + gy          # row of channel 0
    idx = jnp.stack([row0, gx]).astype(jnp.int32)       # (2, N) -> SMEM

    rad = rotation.astype(jnp.float32)[object_idxs] * (2.0 * 3.14159)  # spec constant
    scm = jnp.stack([jnp.sin(rad), jnp.cos(rad),
                     has_rotation[object_idxs].astype(jnp.float32)])   # (3, N) -> SMEM

    # ---- VMEM budget (portable: v5e 16 MiB scoped / v7x 64 MiB physical) ----
    w_pad = -(-W // 128) * 128
    map_vmem_bytes = post2d.shape[0] * w_pad * 4
    assert map_vmem_bytes <= 48 * 1024 * 1024, "prediction map too large for VMEM gather"
    # TODO(synk): for larger maps keep post in HBM (memory_space=pl.ANY) and
    # DMA-gather the needed rows with pltpu.make_async_copy instead.
    vmem_limit = int(min(max(map_vmem_bytes + (2 << 20), 4 << 20), 64 << 20))

    kernel = partial(_adv_loss_kernel, lambda_1=lambda_1, lambda_2=lambda_2,
                     h=H, w=W, n=n)
    out = pl.pallas_call(
        kernel,
        out_shape=jax.ShapeDtypeStruct((1, 1), jnp.float32),
        in_specs=[pl.BlockSpec(memory_space=pltpu.MemorySpace.SMEM),   # idx
                  pl.BlockSpec(memory_space=pltpu.MemorySpace.SMEM),   # scm
                  pl.BlockSpec(memory_space=pltpu.MemorySpace.VMEM)],  # post map
        out_specs=pl.BlockSpec(memory_space=pltpu.MemorySpace.SMEM),
        compiler_params=pltpu.CompilerParams(vmem_limit_bytes=vmem_limit),
        cost_estimate=pl.CostEstimate(
            flops=10 * n * W, transcendentals=0,
            bytes_accessed=post2d.size * 4 + idx.size * 4 + scm.size * 4 + 4),
    )(idx, scm, post2d)
    return out[0, 0]


def _numpy_reference(post, rotation, has_rotation, object_idxs,
                     img_idxs, head_idxs, gy, gx, eccentricity=3.0):
    lambda_1 = 2.0 / (1.0 + eccentricity)
    lambda_2 = 2.0 - lambda_1
    valid = has_rotation[object_idxs]
    obj = object_idxs[valid]
    img, head, y, x = img_idxs[valid], head_idxs[valid], gy[valid], gx[valid]
    rot_rad = rotation[obj] * (2.0 * 3.14159)
    s, c = np.sin(rot_rad), np.cos(rot_rad)
    pred = post[img, head, :, y, x]                   # (n_valid, 2)
    a1, a2 = pred[:, 0], pred[:, 1]
    p1 = a1 * s + a2 * c
    p2 = a1 * c - a2 * s
    return float(np.sum((p1 - 1.0) ** 2) * lambda_1 + np.sum(p2 ** 2) * lambda_2)


if __name__ == "__main__":
    key = jax.random.PRNGKey(0)
    ks = jax.random.split(key, 8)

    B, HEADS, H, W = 2, 4, 16, 16
    NUM_OBJ, NUM_ASSIGN = 10, 8

    # post-activation sin/cos prediction maps: (B, heads, 2, H, W)
    post = jnp.tanh(jax.random.normal(ks[0], (B, HEADS, 2, H, W), jnp.float32))
    # annotation block
    rotation = jax.random.uniform(ks[1], (NUM_OBJ,), jnp.float32)      # in [0, 1)
    has_rotation = jax.random.bernoulli(ks[2], 0.7, (NUM_OBJ,))
    # label assignment
    object_idxs = jax.random.randint(ks[3], (NUM_ASSIGN,), 0, NUM_OBJ)
    img_idxs = jax.random.randint(ks[4], (NUM_ASSIGN,), 0, B)
    head_idxs = jax.random.randint(ks[5], (NUM_ASSIGN,), 0, HEADS)
    grid_y_idxs = jax.random.randint(ks[6], (NUM_ASSIGN,), 0, H)
    grid_x_idxs = jax.random.randint(ks[7], (NUM_ASSIGN,), 0, W)

    loss = adv_loss(post, rotation, has_rotation, object_idxs,
                    img_idxs, head_idxs, grid_y_idxs, grid_x_idxs,
                    eccentricity=3.0)
    loss = jax.block_until_ready(loss)

    ref = _numpy_reference(
        np.asarray(post), np.asarray(rotation), np.asarray(has_rotation),
        np.asarray(object_idxs), np.asarray(img_idxs), np.asarray(head_idxs),
        np.asarray(grid_y_idxs), np.asarray(grid_x_idxs), eccentricity=3.0)

    assert np.isfinite(float(loss))
    assert abs(float(loss) - ref) <= 1e-3 * max(1.0, abs(ref)), (float(loss), ref)
    print("KERNEL_OK")
</pallas_src>

<mosaic_0001>
module attributes {stable_mosaic.version = 11 : i64} {
  func.func @_adv_loss_kernel(%arg0: memref<2x8xi32, #tpu.memory_space<smem>>, %arg1: memref<3x8xf32, #tpu.memory_space<smem>>, %arg2: memref<256x16xf32, #tpu.memory_space<vmem>>, %arg3: memref<1x1xf32, #tpu.memory_space<smem>>) attributes {dimension_semantics = [], scalar_prefetch = 0 : i64, scratch_operands = 0 : i64, tpu.core_type = #tpu.core_type<tc>} {
    %0 = tpu.iota {dimensions = array<i32: 1>} : vector<1x16xi32>
    %cst = arith.constant 0.000000e+00 : f32
    %1 = vector.broadcast %cst : f32 to vector<1x16xf32>
    %c0_i32 = arith.constant 0 : i32
    %c0 = arith.constant 0 : index
    %2 = arith.index_cast %c0_i32 : i32 to index
    %3 = memref.load %arg0[%c0, %2] : memref<2x8xi32, #tpu.memory_space<smem>>
    %c1 = arith.constant 1 : index
    %4 = arith.index_cast %c0_i32 : i32 to index
    %5 = memref.load %arg0[%c1, %4] : memref<2x8xi32, #tpu.memory_space<smem>>
    %c0_0 = arith.constant 0 : index
    %6 = arith.index_cast %c0_i32 : i32 to index
    %7 = memref.load %arg1[%c0_0, %6] : memref<3x8xf32, #tpu.memory_space<smem>>
    %c1_1 = arith.constant 1 : index
    %8 = arith.index_cast %c0_i32 : i32 to index
    %9 = memref.load %arg1[%c1_1, %8] : memref<3x8xf32, #tpu.memory_space<smem>>
    %c2 = arith.constant 2 : index
    %10 = arith.index_cast %c0_i32 : i32 to index
    %11 = memref.load %arg1[%c2, %10] : memref<3x8xf32, #tpu.memory_space<smem>>
    %12 = arith.index_cast %3 : i32 to index
    %c0_2 = arith.constant 0 : index
    %13 = vector.load %arg2[%12, %c0_2] : memref<256x16xf32, #tpu.memory_space<vmem>>, vector<1x16xf32>
    %c16_i32 = arith.constant 16 : i32
    %14 = arith.addi %3, %c16_i32 : i32
    %15 = arith.index_cast %14 : i32 to index
    %c0_3 = arith.constant 0 : index
    %16 = vector.load %arg2[%15, %c0_3] : memref<256x16xf32, #tpu.memory_space<vmem>>, vector<1x16xf32>
    %17 = vector.broadcast %7 : f32 to vector<1x16xf32>
    %18 = arith.mulf %13, %17 : vector<1x16xf32>
    %19 = vector.broadcast %9 : f32 to vector<1x16xf32>
    %20 = arith.mulf %16, %19 : vector<1x16xf32>
    %21 = arith.addf %18, %20 : vector<1x16xf32>
    %22 = vector.broadcast %9 : f32 to vector<1x16xf32>
    %23 = arith.mulf %13, %22 : vector<1x16xf32>
    %24 = vector.broadcast %7 : f32 to vector<1x16xf32>
    %25 = arith.mulf %16, %24 : vector<1x16xf32>
    %26 = arith.subf %23, %25 : vector<1x16xf32>
    %cst_4 = arith.constant 1.000000e+00 : f32
    %27 = vector.broadcast %cst_4 : f32 to vector<1x16xf32>
    %28 = arith.subf %21, %27 : vector<1x16xf32>
    %29 = vector.broadcast %5 : i32 to vector<1x16xi32>
    %30 = arith.cmpi eq, %0, %29 : vector<1x16xi32>
    %cst_5 = arith.constant 5.000000e-01 : f32
    %31 = vector.broadcast %cst_5 : f32 to vector<1x16xf32>
    %32 = arith.mulf %31, %28 : vector<1x16xf32>
    %33 = arith.mulf %32, %28 : vector<1x16xf32>
    %cst_6 = arith.constant 1.500000e+00 : f32
    %34 = vector.broadcast %cst_6 : f32 to vector<1x16xf32>
    %35 = arith.mulf %34, %26 : vector<1x16xf32>
    %36 = arith.mulf %35, %26 : vector<1x16xf32>
    %37 = arith.addf %33, %36 : vector<1x16xf32>
    %38 = vector.broadcast %11 : f32 to vector<1x16xf32>
    %39 = arith.mulf %38, %37 : vector<1x16xf32>
    %cst_7 = arith.constant 0.000000e+00 : f32
    %40 = vector.broadcast %cst_7 : f32 to vector<1x16xf32>
    %41 = arith.select %30, %39, %40 : vector<1x16xi1>, vector<1x16xf32>
    %42 = arith.addf %1, %41 : vector<1x16xf32>
    %c1_i32 = arith.constant 1 : i32
    %c0_8 = arith.constant 0 : index
    %43 = arith.index_cast %c1_i32 : i32 to index
    %44 = memref.load %arg0[%c0_8, %43] : memref<2x8xi32, #tpu.memory_space<smem>>
    %c1_9 = arith.constant 1 : index
    %45 = arith.index_cast %c1_i32 : i32 to index
    %46 = memref.load %arg0[%c1_9, %45] : memref<2x8xi32, #tpu.memory_space<smem>>
    %c0_10 = arith.constant 0 : index
    %47 = arith.index_cast %c1_i32 : i32 to index
    %48 = memref.load %arg1[%c0_10, %47] : memref<3x8xf32, #tpu.memory_space<smem>>
    %c1_11 = arith.constant 1 : index
    %49 = arith.index_cast %c1_i32 : i32 to index
    %50 = memref.load %arg1[%c1_11, %49] : memref<3x8xf32, #tpu.memory_space<smem>>
    %c2_12 = arith.constant 2 : index
    %51 = arith.index_cast %c1_i32 : i32 to index
    %52 = memref.load %arg1[%c2_12, %51] : memref<3x8xf32, #tpu.memory_space<smem>>
    %53 = arith.index_cast %44 : i32 to index
    %c0_13 = arith.constant 0 : index
    %54 = vector.load %arg2[%53, %c0_13] : memref<256x16xf32, #tpu.memory_space<vmem>>, vector<1x16xf32>
    %c16_i32_14 = arith.constant 16 : i32
    %55 = arith.addi %44, %c16_i32_14 : i32
    %56 = arith.index_cast %55 : i32 to index
    %c0_15 = arith.constant 0 : index
    %57 = vector.load %arg2[%56, %c0_15] : memref<256x16xf32, #tpu.memory_space<vmem>>, vector<1x16xf32>
    %58 = vector.broadcast %48 : f32 to vector<1x16xf32>
    %59 = arith.mulf %54, %58 : vector<1x16xf32>
    %60 = vector.broadcast %50 : f32 to vector<1x16xf32>
    %61 = arith.mulf %57, %60 : vector<1x16xf32>
    %62 = arith.addf %59, %61 : vector<1x16xf32>
    %63 = vector.broadcast %50 : f32 to vector<1x16xf32>
    %64 = arith.mulf %54, %63 : vector<1x16xf32>
    %65 = vector.broadcast %48 : f32 to vector<1x16xf32>
    %66 = arith.mulf %57, %65 : vector<1x16xf32>
    %67 = arith.subf %64, %66 : vector<1x16xf32>
    %cst_16 = arith.constant 1.000000e+00 : f32
    %68 = vector.broadcast %cst_16 : f32 to vector<1x16xf32>
    %69 = arith.subf %62, %68 : vector<1x16xf32>
    %70 = vector.broadcast %46 : i32 to vector<1x16xi32>
    %71 = arith.cmpi eq, %0, %70 : vector<1x16xi32>
    %cst_17 = arith.constant 5.000000e-01 : f32
    %72 = vector.broadcast %cst_17 : f32 to vector<1x16xf32>
    %73 = arith.mulf %72, %69 : vector<1x16xf32>
    %74 = arith.mulf %73, %69 : vector<1x16xf32>
    %cst_18 = arith.constant 1.500000e+00 : f32
    %75 = vector.broadcast %cst_18 : f32 to vector<1x16xf32>
    %76 = arith.mulf %75, %67 : vector<1x16xf32>
    %77 = arith.mulf %76, %67 : vector<1x16xf32>
    %78 = arith.addf %74, %77 : vector<1x16xf32>
    %79 = vector.broadcast %52 : f32 to vector<1x16xf32>
    %80 = arith.mulf %79, %78 : vector<1x16xf32>
    %cst_19 = arith.constant 0.000000e+00 : f32
    %81 = vector.broadcast %cst_19 : f32 to vector<1x16xf32>
    %82 = arith.select %71, %80, %81 : vector<1x16xi1>, vector<1x16xf32>
    %83 = arith.addf %42, %82 : vector<1x16xf32>
    %c2_i32 = arith.constant 2 : i32
    %c0_20 = arith.constant 0 : index
    %84 = arith.index_cast %c2_i32 : i32 to index
    %85 = memref.load %arg0[%c0_20, %84] : memref<2x8xi32, #tpu.memory_space<smem>>
    %c1_21 = arith.constant 1 : index
    %86 = arith.index_cast %c2_i32 : i32 to index
    %87 = memref.load %arg0[%c1_21, %86] : memref<2x8xi32, #tpu.memory_space<smem>>
    %c0_22 = arith.constant 0 : index
    %88 = arith.index_cast %c2_i32 : i32 to index
    %89 = memref.load %arg1[%c0_22, %88] : memref<3x8xf32, #tpu.memory_space<smem>>
    %c1_23 = arith.constant 1 : index
    %90 = arith.index_cast %c2_i32 : i32 to index
    %91 = memref.load %arg1[%c1_23, %90] : memref<3x8xf32, #tpu.memory_space<smem>>
    %c2_24 = arith.constant 2 : index
    %92 = arith.index_cast %c2_i32 : i32 to index
    %93 = memref.load %arg1[%c2_24, %92] : memref<3x8xf32, #tpu.memory_space<smem>>
    %94 = arith.index_cast %85 : i32 to index
    %c0_25 = arith.constant 0 : index
    %95 = vector.load %arg2[%94, %c0_25] : memref<256x16xf32, #tpu.memory_space<vmem>>, vector<1x16xf32>
    %c16_i32_26 = arith.constant 16 : i32
    %96 = arith.addi %85, %c16_i32_26 : i32
    %97 = arith.index_cast %96 : i32 to index
    %c0_27 = arith.constant 0 : index
    %98 = vector.load %arg2[%97, %c0_27] : memref<256x16xf32, #tpu.memory_space<vmem>>, vector<1x16xf32>
    %99 = vector.broadcast %89 : f32 to vector<1x16xf32>
    %100 = arith.mulf %95, %99 : vector<1x16xf32>
    %101 = vector.broadcast %91 : f32 to vector<1x16xf32>
    %102 = arith.mulf %98, %101 : vector<1x16xf32>
    %103 = arith.addf %100, %102 : vector<1x16xf32>
    %104 = vector.broadcast %91 : f32 to vector<1x16xf32>
    %105 = arith.mulf %95, %104 : vector<1x16xf32>
    %106 = vector.broadcast %89 : f32 to vector<1x16xf32>
    %107 = arith.mulf %98, %106 : vector<1x16xf32>
    %108 = arith.subf %105, %107 : vector<1x16xf32>
    %cst_28 = arith.constant 1.000000e+00 : f32
    %109 = vector.broadcast %cst_28 : f32 to vector<1x16xf32>
    %110 = arith.subf %103, %109 : vector<1x16xf32>
    %111 = vector.broadcast %87 : i32 to vector<1x16xi32>
    %112 = arith.cmpi eq, %0, %111 : vector<1x16xi32>
    %cst_29 = arith.constant 5.000000e-01 : f32
    %113 = vector.broadcast %cst_29 : f32 to vector<1x16xf32>
    %114 = arith.mulf %113, %110 : vector<1x16xf32>
    %115 = arith.mulf %114, %110 : vector<1x16xf32>
    %cst_30 = arith.constant 1.500000e+00 : f32
    %116 = vector.broadcast %cst_30 : f32 to vector<1x16xf32>
    %117 = arith.mulf %116, %108 : vector<1x16xf32>
    %118 = arith.mulf %117, %108 : vector<1x16xf32>
    %119 = arith.addf %115, %118 : vector<1x16xf32>
    %120 = vector.broadcast %93 : f32 to vector<1x16xf32>
    %121 = arith.mulf %120, %119 : vector<1x16xf32>
    %cst_31 = arith.constant 0.000000e+00 : f32
    %122 = vector.broadcast %cst_31 : f32 to vector<1x16xf32>
    %123 = arith.select %112, %121, %122 : vector<1x16xi1>, vector<1x16xf32>
    %124 = arith.addf %83, %123 : vector<1x16xf32>
    %c3_i32 = arith.constant 3 : i32
    %c0_32 = arith.constant 0 : index
    %125 = arith.index_cast %c3_i32 : i32 to index
    %126 = memref.load %arg0[%c0_32, %125] : memref<2x8xi32, #tpu.memory_space<smem>>
    %c1_33 = arith.constant 1 : index
    %127 = arith.index_cast %c3_i32 : i32 to index
    %128 = memref.load %arg0[%c1_33, %127] : memref<2x8xi32, #tpu.memory_space<smem>>
    %c0_34 = arith.constant 0 : index
    %129 = arith.index_cast %c3_i32 : i32 to index
    %130 = memref.load %arg1[%c0_34, %129] : memref<3x8xf32, #tpu.memory_space<smem>>
    %c1_35 = arith.constant 1 : index
    %131 = arith.index_cast %c3_i32 : i32 to index
    %132 = memref.load %arg1[%c1_35, %131] : memref<3x8xf32, #tpu.memory_space<smem>>
    %c2_36 = arith.constant 2 : index
    %133 = arith.index_cast %c3_i32 : i32 to index
    %134 = memref.load %arg1[%c2_36, %133] : memref<3x8xf32, #tpu.memory_space<smem>>
    %135 = arith.index_cast %126 : i32 to index
    %c0_37 = arith.constant 0 : index
    %136 = vector.load %arg2[%135, %c0_37] : memref<256x16xf32, #tpu.memory_space<vmem>>, vector<1x16xf32>
    %c16_i32_38 = arith.constant 16 : i32
    %137 = arith.addi %126, %c16_i32_38 : i32
    %138 = arith.index_cast %137 : i32 to index
    %c0_39 = arith.constant 0 : index
    %139 = vector.load %arg2[%138, %c0_39] : memref<256x16xf32, #tpu.memory_space<vmem>>, vector<1x16xf32>
    %140 = vector.broadcast %130 : f32 to vector<1x16xf32>
    %141 = arith.mulf %136, %140 : vector<1x16xf32>
    %142 = vector.broadcast %132 : f32 to vector<1x16xf32>
    %143 = arith.mulf %139, %142 : vector<1x16xf32>
    %144 = arith.addf %141, %143 : vector<1x16xf32>
    %145 = vector.broadcast %132 : f32 to vector<1x16xf32>
    %146 = arith.mulf %136, %145 : vector<1x16xf32>
    %147 = vector.broadcast %130 : f32 to vector<1x16xf32>
    %148 = arith.mulf %139, %147 : vector<1x16xf32>
    %149 = arith.subf %146, %148 : vector<1x16xf32>
    %cst_40 = arith.constant 1.000000e+00 : f32
    %150 = vector.broadcast %cst_40 : f32 to vector<1x16xf32>
    %151 = arith.subf %144, %150 : vector<1x16xf32>
    %152 = vector.broadcast %128 : i32 to vector<1x16xi32>
    %153 = arith.cmpi eq, %0, %152 : vector<1x16xi32>
    %cst_41 = arith.constant 5.000000e-01 : f32
    %154 = vector.broadcast %cst_41 : f32 to vector<1x16xf32>
    %155 = arith.mulf %154, %151 : vector<1x16xf32>
    %156 = arith.mulf %155, %151 : vector<1x16xf32>
    %cst_42 = arith.constant 1.500000e+00 : f32
    %157 = vector.broadcast %cst_42 : f32 to vector<1x16xf32>
    %158 = arith.mulf %157, %149 : vector<1x16xf32>
    %159 = arith.mulf %158, %149 : vector<1x16xf32>
    %160 = arith.addf %156, %159 : vector<1x16xf32>
    %161 = vector.broadcast %134 : f32 to vector<1x16xf32>
    %162 = arith.mulf %161, %160 : vector<1x16xf32>
    %cst_43 = arith.constant 0.000000e+00 : f32
    %163 = vector.broadcast %cst_43 : f32 to vector<1x16xf32>
    %164 = arith.select %153, %162, %163 : vector<1x16xi1>, vector<1x16xf32>
    %165 = arith.addf %124, %164 : vector<1x16xf32>
    %c4_i32 = arith.constant 4 : i32
    %c0_44 = arith.constant 0 : index
    %166 = arith.index_cast %c4_i32 : i32 to index
    %167 = memref.load %arg0[%c0_44, %166] : memref<2x8xi32, #tpu.memory_space<smem>>
    %c1_45 = arith.constant 1 : index
    %168 = arith.index_cast %c4_i32 : i32 to index
    %169 = memref.load %arg0[%c1_45, %168] : memref<2x8xi32, #tpu.memory_space<smem>>
    %c0_46 = arith.constant 0 : index
    %170 = arith.index_cast %c4_i32 : i32 to index
    %171 = memref.load %arg1[%c0_46, %170] : memref<3x8xf32, #tpu.memory_space<smem>>
    %c1_47 = arith.constant 1 : index
    %172 = arith.index_cast %c4_i32 : i32 to index
    %173 = memref.load %arg1[%c1_47, %172] : memref<3x8xf32, #tpu.memory_space<smem>>
    %c2_48 = arith.constant 2 : index
    %174 = arith.index_cast %c4_i32 : i32 to index
    %175 = memref.load %arg1[%c2_48, %174] : memref<3x8xf32, #tpu.memory_space<smem>>
    %176 = arith.index_cast %167 : i32 to index
    %c0_49 = arith.constant 0 : index
    %177 = vector.load %arg2[%176, %c0_49] : memref<256x16xf32, #tpu.memory_space<vmem>>, vector<1x16xf32>
    %c16_i32_50 = arith.constant 16 : i32
    %178 = arith.addi %167, %c16_i32_50 : i32
    %179 = arith.index_cast %178 : i32 to index
    %c0_51 = arith.constant 0 : index
    %180 = vector.load %arg2[%179, %c0_51] : memref<256x16xf32, #tpu.memory_space<vmem>>, vector<1x16xf32>
    %181 = vector.broadcast %171 : f32 to vector<1x16xf32>
    %182 = arith.mulf %177, %181 : vector<1x16xf32>
    %183 = vector.broadcast %173 : f32 to vector<1x16xf32>
    %184 = arith.mulf %180, %183 : vector<1x16xf32>
    %185 = arith.addf %182, %184 : vector<1x16xf32>
    %186 = vector.broadcast %173 : f32 to vector<1x16xf32>
    %187 = arith.mulf %177, %186 : vector<1x16xf32>
    %188 = vector.broadcast %171 : f32 to vector<1x16xf32>
    %189 = arith.mulf %180, %188 : vector<1x16xf32>
    %190 = arith.subf %187, %189 : vector<1x16xf32>
    %cst_52 = arith.constant 1.000000e+00 : f32
    %191 = vector.broadcast %cst_52 : f32 to vector<1x16xf32>
    %192 = arith.subf %185, %191 : vector<1x16xf32>
    %193 = vector.broadcast %169 : i32 to vector<1x16xi32>
    %194 = arith.cmpi eq, %0, %193 : vector<1x16xi32>
    %cst_53 = arith.constant 5.000000e-01 : f32
    %195 = vector.broadcast %cst_53 : f32 to vector<1x16xf32>
    %196 = arith.mulf %195, %192 : vector<1x16xf32>
    %197 = arith.mulf %196, %192 : vector<1x16xf32>
    %cst_54 = arith.constant 1.500000e+00 : f32
    %198 = vector.broadcast %cst_54 : f32 to vector<1x16xf32>
    %199 = arith.mulf %198, %190 : vector<1x16xf32>
    %200 = arith.mulf %199, %190 : vector<1x16xf32>
    %201 = arith.addf %197, %200 : vector<1x16xf32>
    %202 = vector.broadcast %175 : f32 to vector<1x16xf32>
    %203 = arith.mulf %202, %201 : vector<1x16xf32>
    %cst_55 = arith.constant 0.000000e+00 : f32
    %204 = vector.broadcast %cst_55 : f32 to vector<1x16xf32>
    %205 = arith.select %194, %203, %204 : vector<1x16xi1>, vector<1x16xf32>
    %206 = arith.addf %165, %205 : vector<1x16xf32>
    %c5_i32 = arith.constant 5 : i32
    %c0_56 = arith.constant 0 : index
    %207 = arith.index_cast %c5_i32 : i32 to index
    %208 = memref.load %arg0[%c0_56, %207] : memref<2x8xi32, #tpu.memory_space<smem>>
    %c1_57 = arith.constant 1 : index
    %209 = arith.index_cast %c5_i32 : i32 to index
    %210 = memref.load %arg0[%c1_57, %209] : memref<2x8xi32, #tpu.memory_space<smem>>
    %c0_58 = arith.constant 0 : index
    %211 = arith.index_cast %c5_i32 : i32 to index
    %212 = memref.load %arg1[%c0_58, %211] : memref<3x8xf32, #tpu.memory_space<smem>>
    %c1_59 = arith.constant 1 : index
    %213 = arith.index_cast %c5_i32 : i32 to index
    %214 = memref.load %arg1[%c1_59, %213] : memref<3x8xf32, #tpu.memory_space<smem>>
    %c2_60 = arith.constant 2 : index
    %215 = arith.index_cast %c5_i32 : i32 to index
    %216 = memref.load %arg1[%c2_60, %215] : memref<3x8xf32, #tpu.memory_space<smem>>
    %217 = arith.index_cast %208 : i32 to index
    %c0_61 = arith.constant 0 : index
    %218 = vector.load %arg2[%217, %c0_61] : memref<256x16xf32, #tpu.memory_space<vmem>>, vector<1x16xf32>
    %c16_i32_62 = arith.constant 16 : i32
    %219 = arith.addi %208, %c16_i32_62 : i32
    %220 = arith.index_cast %219 : i32 to index
    %c0_63 = arith.constant 0 : index
    %221 = vector.load %arg2[%220, %c0_63] : memref<256x16xf32, #tpu.memory_space<vmem>>, vector<1x16xf32>
    %222 = vector.broadcast %212 : f32 to vector<1x16xf32>
    %223 = arith.mulf %218, %222 : vector<1x16xf32>
    %224 = vector.broadcast %214 : f32 to vector<1x16xf32>
    %225 = arith.mulf %221, %224 : vector<1x16xf32>
    %226 = arith.addf %223, %225 : vector<1x16xf32>
    %227 = vector.broadcast %214 : f32 to vector<1x16xf32>
    %228 = arith.mulf %218, %227 : vector<1x16xf32>
    %229 = vector.broadcast %212 : f32 to vector<1x16xf32>
    %230 = arith.mulf %221, %229 : vector<1x16xf32>
    %231 = arith.subf %228, %230 : vector<1x16xf32>
    %cst_64 = arith.constant 1.000000e+00 : f32
    %232 = vector.broadcast %cst_64 : f32 to vector<1x16xf32>
    %233 = arith.subf %226, %232 : vector<1x16xf32>
    %234 = vector.broadcast %210 : i32 to vector<1x16xi32>
    %235 = arith.cmpi eq, %0, %234 : vector<1x16xi32>
    %cst_65 = arith.constant 5.000000e-01 : f32
    %236 = vector.broadcast %cst_65 : f32 to vector<1x16xf32>
    %237 = arith.mulf %236, %233 : vector<1x16xf32>
    %238 = arith.mulf %237, %233 : vector<1x16xf32>
    %cst_66 = arith.constant 1.500000e+00 : f32
    %239 = vector.broadcast %cst_66 : f32 to vector<1x16xf32>
    %240 = arith.mulf %239, %231 : vector<1x16xf32>
    %241 = arith.mulf %240, %231 : vector<1x16xf32>
    %242 = arith.addf %238, %241 : vector<1x16xf32>
    %243 = vector.broadcast %216 : f32 to vector<1x16xf32>
    %244 = arith.mulf %243, %242 : vector<1x16xf32>
    %cst_67 = arith.constant 0.000000e+00 : f32
    %245 = vector.broadcast %cst_67 : f32 to vector<1x16xf32>
    %246 = arith.select %235, %244, %245 : vector<1x16xi1>, vector<1x16xf32>
    %247 = arith.addf %206, %246 : vector<1x16xf32>
    %c6_i32 = arith.constant 6 : i32
    %c0_68 = arith.constant 0 : index
    %248 = arith.index_cast %c6_i32 : i32 to index
    %249 = memref.load %arg0[%c0_68, %248] : memref<2x8xi32, #tpu.memory_space<smem>>
    %c1_69 = arith.constant 1 : index
    %250 = arith.index_cast %c6_i32 : i32 to index
    %251 = memref.load %arg0[%c1_69, %250] : memref<2x8xi32, #tpu.memory_space<smem>>
    %c0_70 = arith.constant 0 : index
    %252 = arith.index_cast %c6_i32 : i32 to index
    %253 = memref.load %arg1[%c0_70, %252] : memref<3x8xf32, #tpu.memory_space<smem>>
    %c1_71 = arith.constant 1 : index
    %254 = arith.index_cast %c6_i32 : i32 to index
    %255 = memref.load %arg1[%c1_71, %254] : memref<3x8xf32, #tpu.memory_space<smem>>
    %c2_72 = arith.constant 2 : index
    %256 = arith.index_cast %c6_i32 : i32 to index
    %257 = memref.load %arg1[%c2_72, %256] : memref<3x8xf32, #tpu.memory_space<smem>>
    %258 = arith.index_cast %249 : i32 to index
    %c0_73 = arith.constant 0 : index
    %259 = vector.load %arg2[%258, %c0_73] : memref<256x16xf32, #tpu.memory_space<vmem>>, vector<1x16xf32>
    %c16_i32_74 = arith.constant 16 : i32
    %260 = arith.addi %249, %c16_i32_74 : i32
    %261 = arith.index_cast %260 : i32 to index
    %c0_75 = arith.constant 0 : index
    %262 = vector.load %arg2[%261, %c0_75] : memref<256x16xf32, #tpu.memory_space<vmem>>, vector<1x16xf32>
    %263 = vector.broadcast %253 : f32 to vector<1x16xf32>
    %264 = arith.mulf %259, %263 : vector<1x16xf32>
    %265 = vector.broadcast %255 : f32 to vector<1x16xf32>
    %266 = arith.mulf %262, %265 : vector<1x16xf32>
    %267 = arith.addf %264, %266 : vector<1x16xf32>
    %268 = vector.broadcast %255 : f32 to vector<1x16xf32>
    %269 = arith.mulf %259, %268 : vector<1x16xf32>
    %270 = vector.broadcast %253 : f32 to vector<1x16xf32>
    %271 = arith.mulf %262, %270 : vector<1x16xf32>
    %272 = arith.subf %269, %271 : vector<1x16xf32>
    %cst_76 = arith.constant 1.000000e+00 : f32
    %273 = vector.broadcast %cst_76 : f32 to vector<1x16xf32>
    %274 = arith.subf %267, %273 : vector<1x16xf32>
    %275 = vector.broadcast %251 : i32 to vector<1x16xi32>
    %276 = arith.cmpi eq, %0, %275 : vector<1x16xi32>
    %cst_77 = arith.constant 5.000000e-01 : f32
    %277 = vector.broadcast %cst_77 : f32 to vector<1x16xf32>
    %278 = arith.mulf %277, %274 : vector<1x16xf32>
    %279 = arith.mulf %278, %274 : vector<1x16xf32>
    %cst_78 = arith.constant 1.500000e+00 : f32
    %280 = vector.broadcast %cst_78 : f32 to vector<1x16xf32>
    %281 = arith.mulf %280, %272 : vector<1x16xf32>
    %282 = arith.mulf %281, %272 : vector<1x16xf32>
    %283 = arith.addf %279, %282 : vector<1x16xf32>
    %284 = vector.broadcast %257 : f32 to vector<1x16xf32>
    %285 = arith.mulf %284, %283 : vector<1x16xf32>
    %cst_79 = arith.constant 0.000000e+00 : f32
    %286 = vector.broadcast %cst_79 : f32 to vector<1x16xf32>
    %287 = arith.select %276, %285, %286 : vector<1x16xi1>, vector<1x16xf32>
    %288 = arith.addf %247, %287 : vector<1x16xf32>
    %c7_i32 = arith.constant 7 : i32
    %c0_80 = arith.constant 0 : index
    %289 = arith.index_cast %c7_i32 : i32 to index
    %290 = memref.load %arg0[%c0_80, %289] : memref<2x8xi32, #tpu.memory_space<smem>>
    %c1_81 = arith.constant 1 : index
    %291 = arith.index_cast %c7_i32 : i32 to index
    %292 = memref.load %arg0[%c1_81, %291] : memref<2x8xi32, #tpu.memory_space<smem>>
    %c0_82 = arith.constant 0 : index
    %293 = arith.index_cast %c7_i32 : i32 to index
    %294 = memref.load %arg1[%c0_82, %293] : memref<3x8xf32, #tpu.memory_space<smem>>
    %c1_83 = arith.constant 1 : index
    %295 = arith.index_cast %c7_i32 : i32 to index
    %296 = memref.load %arg1[%c1_83, %295] : memref<3x8xf32, #tpu.memory_space<smem>>
    %c2_84 = arith.constant 2 : index
    %297 = arith.index_cast %c7_i32 : i32 to index
    %298 = memref.load %arg1[%c2_84, %297] : memref<3x8xf32, #tpu.memory_space<smem>>
    %299 = arith.index_cast %290 : i32 to index
    %c0_85 = arith.constant 0 : index
    %300 = vector.load %arg2[%299, %c0_85] : memref<256x16xf32, #tpu.memory_space<vmem>>, vector<1x16xf32>
    %c16_i32_86 = arith.constant 16 : i32
    %301 = arith.addi %290, %c16_i32_86 : i32
    %302 = arith.index_cast %301 : i32 to index
    %c0_87 = arith.constant 0 : index
    %303 = vector.load %arg2[%302, %c0_87] : memref<256x16xf32, #tpu.memory_space<vmem>>, vector<1x16xf32>
    %304 = vector.broadcast %294 : f32 to vector<1x16xf32>
    %305 = arith.mulf %300, %304 : vector<1x16xf32>
    %306 = vector.broadcast %296 : f32 to vector<1x16xf32>
    %307 = arith.mulf %303, %306 : vector<1x16xf32>
    %308 = arith.addf %305, %307 : vector<1x16xf32>
    %309 = vector.broadcast %296 : f32 to vector<1x16xf32>
    %310 = arith.mulf %300, %309 : vector<1x16xf32>
    %311 = vector.broadcast %294 : f32 to vector<1x16xf32>
    %312 = arith.mulf %303, %311 : vector<1x16xf32>
    %313 = arith.subf %310, %312 : vector<1x16xf32>
    %cst_88 = arith.constant 1.000000e+00 : f32
    %314 = vector.broadcast %cst_88 : f32 to vector<1x16xf32>
    %315 = arith.subf %308, %314 : vector<1x16xf32>
    %316 = vector.broadcast %292 : i32 to vector<1x16xi32>
    %317 = arith.cmpi eq, %0, %316 : vector<1x16xi32>
    %cst_89 = arith.constant 5.000000e-01 : f32
    %318 = vector.broadcast %cst_89 : f32 to vector<1x16xf32>
    %319 = arith.mulf %318, %315 : vector<1x16xf32>
    %320 = arith.mulf %319, %315 : vector<1x16xf32>
    %cst_90 = arith.constant 1.500000e+00 : f32
    %321 = vector.broadcast %cst_90 : f32 to vector<1x16xf32>
    %322 = arith.mulf %321, %313 : vector<1x16xf32>
    %323 = arith.mulf %322, %313 : vector<1x16xf32>
    %324 = arith.addf %320, %323 : vector<1x16xf32>
    %325 = vector.broadcast %298 : f32 to vector<1x16xf32>
    %326 = arith.mulf %325, %324 : vector<1x16xf32>
    %cst_91 = arith.constant 0.000000e+00 : f32
    %327 = vector.broadcast %cst_91 : f32 to vector<1x16xf32>
    %328 = arith.select %317, %326, %327 : vector<1x16xi1>, vector<1x16xf32>
    %329 = arith.addf %288, %328 : vector<1x16xf32>
    %c8_i32 = arith.constant 8 : i32
    %330 = vector.shape_cast %329 : vector<1x16xf32> to vector<1x1x16xf32>
    %cst_92 = arith.constant dense<0.000000e+00> : vector<1xf32>
    %331 = vector.multi_reduction <add>, %330, %cst_92 [1, 2] : vector<1x1x16xf32> to vector<1xf32>
    %332 = vector.shape_cast %331 : vector<1xf32> to vector<1x1x1xf32>
    %333 = vector.extract %332[0, 0, 0] : f32 from vector<1x1x1xf32>
    %c0_93 = arith.constant 0 : index
    %c0_94 = arith.constant 0 : index
    %334 = memref.load %arg3[%c0_93, %c0_94] : memref<1x1xf32, #tpu.memory_space<smem>>
    memref.store %333, %arg3[%c0_93, %c0_94] : memref<1x1xf32, #tpu.memory_space<smem>>
    return
  }
}

</mosaic_0001>

<llo_original>
// kernel: tpu_custom_call.1
$region0: #{tpu_custom_call.1}
  #allocation0 [shape = 'u32[]', space=smem, size = 0x4, offset = 0x4, fixed_abs, tag = 'smem constant byte address 0x4 - core index']
  #allocation1 [shape = 'u32[144,128]{1,0:T(1,128)}', space=vmem, size = 0x12000, scoped, tag = 'internal scratch']
  %s0 = inlined_call_operand.vmem [shape: s32[2,8], index: 0, kind: input, shape index: {}]
  %s1 = inlined_call_operand.vmem [shape: f32[3,8], index: 1, kind: input, shape index: {}]
  %s2 = inlined_call_operand.vmem [shape: f32[256,16], index: 2, kind: input, shape index: {}]
  %s3 = inlined_call_operand.hbm [shape: f32[1,1], index: 3, kind: output, shape index: {}]
  %s4 = sld [smem:[#allocation0]]
  $region30: #{tpu_custom_call.1} parent=0
    _
  %s6 = ssub.s32 1, %s4
  %s7 = scalar_select 0, %s6, %s4
  $region1: #{tpu_custom_call.1} parent=0
    #allocation2 [shape = 'u8[1024]{0}', space=smem, size = 0x400, scoped, tag = 'input window, operand 0, single buffered']
    #allocation3 [shape = 's32[1]{0}', space=sflag, size = 0x4, scoped, tag = 'scoped memory for tpu_custom_call.1']
    #allocation4 [shape = 's32[1]{0}', space=sflag, size = 0x4, scoped, tag = 'scoped memory for tpu_custom_call.1']
    #allocation5 [shape = 'u8[2048]{0}', space=smem, size = 0x800, scoped, tag = 'input window, operand 1, single buffered']
    #allocation6 [shape = 's32[1]{0}', space=sflag, size = 0x4, scoped, tag = 'scoped memory for tpu_custom_call.1']
    #allocation7 [shape = 'u8[512]{0}', space=smem, size = 0x200, scoped, tag = 'output window, operand 0, single buffered']
    %8 = vsyncpa [#allocation4], 0
    %9 = vsyncpa [#allocation6], 0
    %10 = vsyncpa [#allocation3], 0
    // Predicated region
    $region2: #{tpu_custom_call.1} parent=1 // pred_check
      _
    $region3: #{tpu_custom_call.1} parent=1 // pred_check_branch
      %12 = sbr.rel (0) target = $region5
    $region4: #{tpu_custom_call.1} parent=1 // pred_region
      %s14 = ssub.s32 32, 32
      %15 = vsyncadd [#allocation4], %s14
      %s17 = sshll.u32 %s0, 4
      %s18 = int_to_ptr.vmem [resolvable:$true] %s17
      %20 = dma.vmem_to_smem %s18, 32, [#allocation2], [#allocation4]
    $region5: #{tpu_custom_call.1} parent=1 // pred_fallthru
      _
    // Predicated region
    $region6: #{tpu_custom_call.1} parent=1 // pred_check
      _
    $region7: #{tpu_custom_call.1} parent=1 // pred_check_branch
      %22 = sbr.rel (0) target = $region9
    $region8: #{tpu_custom_call.1} parent=1 // pred_region
      %s24 = ssub.s32 64, 64
      %25 = vsyncadd [#allocation6], %s24
      %s27 = sshll.u32 %s1, 4
      %s28 = int_to_ptr.vmem [resolvable:$true] %s27
      %30 = dma.vmem_to_smem %s28, 64, [#allocation5], [#allocation6]
    $region9: #{tpu_custom_call.1} parent=1 // pred_fallthru
      _
    // Predicated region
    $region10: #{tpu_custom_call.1} parent=1 // pred_check
      _
    $region11: #{tpu_custom_call.1} parent=1 // pred_check_branch
      %32 = sbr.rel (0) target = $region13
    $region12: #{tpu_custom_call.1} parent=1 // pred_region
      _
    $region13: #{tpu_custom_call.1} parent=1 // pred_fallthru
      _
    // Predicated region
    $region14: #{tpu_custom_call.1} parent=1 // pred_check
      _
    $region15: #{tpu_custom_call.1} parent=1 // pred_check_branch
      %34 = sbr.rel (0) target = $region17
    $region16: #{tpu_custom_call.1} parent=1 // pred_region
      %35 = dma.done [#allocation4], 32
    $region17: #{tpu_custom_call.1} parent=1 // pred_fallthru
      _
    // Predicated region
    $region18: #{tpu_custom_call.1} parent=1 // pred_check
      _
    $region19: #{tpu_custom_call.1} parent=1 // pred_check_branch
      %37 = sbr.rel (0) target = $region21
    $region20: #{tpu_custom_call.1} parent=1 // pred_region
      %38 = dma.done [#allocation6], 64
    $region21: #{tpu_custom_call.1} parent=1 // pred_fallthru
      _
    %39 = sfence
    %v40 = vlaneseq
    %v41 = vand.u32 %v40, 127
    %s42 = sld [smem:[#allocation2]]
    %s43 = sld [smem:[#allocation2 + $0x80]]
    %s44 = sld [smem:[#allocation5]]
    %s45 = sld [smem:[#allocation5 + $0x80]]
    %s46 = sld [smem:[#allocation5 + $0x100]]
    %s47 = scalar_lea.vmem %s2, %s42
    %v48 = vld [vmem:[%s47] sm:$0x1]
    %s49 = sadd.s32 %s42, 16
    %s50 = scalar_lea.vmem %s2, %s49
    %v51 = vld [vmem:[%s50] sm:$0x1]
    %v52 = vstv %s44
    %v53 = vmul.f32 %v48, %v52
    %v54 = vstv %s45
    %v55 = vmul.f32 %v51, %v54
    %v56 = vadd.f32 %v53, %v55
    %v57 = vmul.f32 %v48, %v54
    %v58 = vmul.f32 %v51, %v52
    %v59 = vsub.f32 %v57, %v58
    %v60 = vsub.f32 %v56, 1.0
    %v61 = vstv %s43
    %vm62 = vcmp.eq.s32.totalorder %v41, %v61
    %v63 = vmul.f32 %v60, 0.5
    %v64 = vmul.f32 %v63, %v60
    %v65 = vmul.f32 %v59, 1.5
    %v66 = vmul.f32 %v65, %v59
    %v67 = vadd.f32 %v64, %v66
    %v68 = vstv %s46
    %v69 = vmul.f32 %v68, %v67
    %v70 = vsel %vm62, %v69, 0.0
    %v71 = vadd.f32 %v70, 0.0
    %s72 = sld [smem:[#allocation2 + $0x1]]
    %s73 = sld [smem:[#allocation2 + $0x81]]
    %s74 = sld [smem:[#allocation5 + $0x1]]
    %s75 = sld [smem:[#allocation5 + $0x81]]
    %s76 = sld [smem:[#allocation5 + $0x101]]
    %s77 = scalar_lea.vmem %s2, %s72
    %v78 = vld [vmem:[%s77] sm:$0x1]
    %s79 = sadd.s32 %s72, 16
    %s80 = scalar_lea.vmem %s2, %s79
    %v81 = vld [vmem:[%s80] sm:$0x1]
    %v82 = vstv %s74
    %v83 = vmul.f32 %v78, %v82
    %v84 = vstv %s75
    %v85 = vmul.f32 %v81, %v84
    %v86 = vadd.f32 %v83, %v85
    %v87 = vmul.f32 %v78, %v84
    %v88 = vmul.f32 %v81, %v82
    %v89 = vsub.f32 %v87, %v88
    %v90 = vsub.f32 %v86, 1.0
    %v91 = vstv %s73
    %vm92 = vcmp.eq.s32.totalorder %v41, %v91
    %v93 = vmul.f32 %v90, 0.5
    %v94 = vmul.f32 %v93, %v90
    %v95 = vmul.f32 %v89, 1.5
    %v96 = vmul.f32 %v95, %v89
    %v97 = vadd.f32 %v94, %v96
    %v98 = vstv %s76
    %v99 = vmul.f32 %v98, %v97
    %v100 = vsel %vm92, %v99, 0.0
    %v101 = vadd.f32 %v71, %v100
    %s102 = sld [smem:[#allocation2 + $0x2]]
    %s103 = sld [smem:[#allocation2 + $0x82]]
    %s104 = sld [smem:[#allocation5 + $0x2]]
    %s105 = sld [smem:[#allocation5 + $0x82]]
    %s106 = sld [smem:[#allocation5 + $0x102]]
    %s107 = scalar_lea.vmem %s2, %s102
    %v108 = vld [vmem:[%s107] sm:$0x1]
    %s109 = sadd.s32 %s102, 16
    %s110 = scalar_lea.vmem %s2, %s109
    %v111 = vld [vmem:[%s110] sm:$0x1]
    %v112 = vstv %s104
    %v113 = vmul.f32 %v108, %v112
    %v114 = vstv %s105
    %v115 = vmul.f32 %v111, %v114
    %v116 = vadd.f32 %v113, %v115
    %v117 = vmul.f32 %v108, %v114
    %v118 = vmul.f32 %v111, %v112
    %v119 = vsub.f32 %v117, %v118
    %v120 = vsub.f32 %v116, 1.0
    %v121 = vstv %s103
    %vm122 = vcmp.eq.s32.totalorder %v41, %v121
    %v123 = vmul.f32 %v120, 0.5
    %v124 = vmul.f32 %v123, %v120
    %v125 = vmul.f32 %v119, 1.5
    %v126 = vmul.f32 %v125, %v119
    %v127 = vadd.f32 %v124, %v126
    %v128 = vstv %s106
    %v129 = vmul.f32 %v128, %v127
    %v130 = vsel %vm122, %v129, 0.0
    %v131 = vadd.f32 %v101, %v130
    %s132 = sld [smem:[#allocation2 + $0x3]]
    %s133 = sld [smem:[#allocation2 + $0x83]]
    %s134 = sld [smem:[#allocation5 + $0x3]]
    %s135 = sld [smem:[#allocation5 + $0x83]]
    %s136 = sld [smem:[#allocation5 + $0x103]]
    %s137 = scalar_lea.vmem %s2, %s132
    %v138 = vld [vmem:[%s137] sm:$0x1]
    %s139 = sadd.s32 %s132, 16
    %s140 = scalar_lea.vmem %s2, %s139
    %v141 = vld [vmem:[%s140] sm:$0x1]
    %v142 = vstv %s134
    %v143 = vmul.f32 %v138, %v142
    %v144 = vstv %s135
    %v145 = vmul.f32 %v141, %v144
    %v146 = vadd.f32 %v143, %v145
    %v147 = vmul.f32 %v138, %v144
    %v148 = vmul.f32 %v141, %v142
    %v149 = vsub.f32 %v147, %v148
    %v150 = vsub.f32 %v146, 1.0
    %v151 = vstv %s133
    %vm152 = vcmp.eq.s32.totalorder %v41, %v151
    %v153 = vmul.f32 %v150, 0.5
    %v154 = vmul.f32 %v153, %v150
    %v155 = vmul.f32 %v149, 1.5
    %v156 = vmul.f32 %v155, %v149
    %v157 = vadd.f32 %v154, %v156
    %v158 = vstv %s136
    %v159 = vmul.f32 %v158, %v157
    %v160 = vsel %vm152, %v159, 0.0
    %v161 = vadd.f32 %v131, %v160
    %s162 = sld [smem:[#allocation2 + $0x4]]
    %s163 = sld [smem:[#allocation2 + $0x84]]
    %s164 = sld [smem:[#allocation5 + $0x4]]
    %s165 = sld [smem:[#allocation5 + $0x84]]
    %s166 = sld [smem:[#allocation5 + $0x104]]
    %s167 = scalar_lea.vmem %s2, %s162
    %v168 = vld [vmem:[%s167] sm:$0x1]
    %s169 = sadd.s32 %s162, 16
    %s170 = scalar_lea.vmem %s2, %s169
    %v171 = vld [vmem:[%s170] sm:$0x1]
    %v172 = vstv %s164
    %v173 = vmul.f32 %v168, %v172
    %v174 = vstv %s165
    %v175 = vmul.f32 %v171, %v174
    %v176 = vadd.f32 %v173, %v175
    %v177 = vmul.f32 %v168, %v174
    %v178 = vmul.f32 %v171, %v172
    %v179 = vsub.f32 %v177, %v178
    %v180 = vsub.f32 %v176, 1.0
    %v181 = vstv %s163
    %vm182 = vcmp.eq.s32.totalorder %v41, %v181
    %v183 = vmul.f32 %v180, 0.5
    %v184 = vmul.f32 %v183, %v180
    %v185 = vmul.f32 %v179, 1.5
    %v186 = vmul.f32 %v185, %v179
    %v187 = vadd.f32 %v184, %v186
    %v188 = vstv %s166
    %v189 = vmul.f32 %v188, %v187
    %v190 = vsel %vm182, %v189, 0.0
    %v191 = vadd.f32 %v161, %v190
    %s192 = sld [smem:[#allocation2 + $0x5]]
    %s193 = sld [smem:[#allocation2 + $0x85]]
    %s194 = sld [smem:[#allocation5 + $0x5]]
    %s195 = sld [smem:[#allocation5 + $0x85]]
    %s196 = sld [smem:[#allocation5 + $0x105]]
    %s197 = scalar_lea.vmem %s2, %s192
    %v198 = vld [vmem:[%s197] sm:$0x1]
    %s199 = sadd.s32 %s192, 16
    %s200 = scalar_lea.vmem %s2, %s199
    %v201 = vld [vmem:[%s200] sm:$0x1]
    %v202 = vstv %s194
    %v203 = vmul.f32 %v198, %v202
    %v204 = vstv %s195
    %v205 = vmul.f32 %v201, %v204
    %v206 = vadd.f32 %v203, %v205
    %v207 = vmul.f32 %v198, %v204
    %v208 = vmul.f32 %v201, %v202
    %v209 = vsub.f32 %v207, %v208
    %v210 = vsub.f32 %v206, 1.0
    %v211 = vstv %s193
    %vm212 = vcmp.eq.s32.totalorder %v41, %v211
    %v213 = vmul.f32 %v210, 0.5
    %v214 = vmul.f32 %v213, %v210
    %v215 = vmul.f32 %v209, 1.5
    %v216 = vmul.f32 %v215, %v209
    %v217 = vadd.f32 %v214, %v216
    %v218 = vstv %s196
    %v219 = vmul.f32 %v218, %v217
    %v220 = vsel %vm212, %v219, 0.0
    %v221 = vadd.f32 %v191, %v220
    %s222 = sld [smem:[#allocation2 + $0x6]]
    %s223 = sld [smem:[#allocation2 + $0x86]]
    %s224 = sld [smem:[#allocation5 + $0x6]]
    %s225 = sld [smem:[#allocation5 + $0x86]]
    %s226 = sld [smem:[#allocation5 + $0x106]]
    %s227 = scalar_lea.vmem %s2, %s222
    %v228 = vld [vmem:[%s227] sm:$0x1]
    %s229 = sadd.s32 %s222, 16
    %s230 = scalar_lea.vmem %s2, %s229
    %v231 = vld [vmem:[%s230] sm:$0x1]
    %v232 = vstv %s224
    %v233 = vmul.f32 %v228, %v232
    %v234 = vstv %s225
    %v235 = vmul.f32 %v231, %v234
    %v236 = vadd.f32 %v233, %v235
    %v237 = vmul.f32 %v228, %v234
    %v238 = vmul.f32 %v231, %v232
    %v239 = vsub.f32 %v237, %v238
    %v240 = vsub.f32 %v236, 1.0
    %v241 = vstv %s223
    %vm242 = vcmp.eq.s32.totalorder %v41, %v241
    %v243 = vmul.f32 %v240, 0.5
    %v244 = vmul.f32 %v243, %v240
    %v245 = vmul.f32 %v239, 1.5
    %v246 = vmul.f32 %v245, %v239
    %v247 = vadd.f32 %v244, %v246
    %v248 = vstv %s226
    %v249 = vmul.f32 %v248, %v247
    %v250 = vsel %vm242, %v249, 0.0
    %v251 = vadd.f32 %v221, %v250
    %s252 = sld [smem:[#allocation2 + $0x7]]
    %s253 = sld [smem:[#allocation2 + $0x87]]
    %s254 = sld [smem:[#allocation5 + $0x7]]
    %s255 = sld [smem:[#allocation5 + $0x87]]
    %s256 = sld [smem:[#allocation5 + $0x107]]
    %s257 = scalar_lea.vmem %s2, %s252
    %v258 = vld [vmem:[%s257] sm:$0x1]
    %s259 = sadd.s32 %s252, 16
    %s260 = scalar_lea.vmem %s2, %s259
    %v261 = vld [vmem:[%s260] sm:$0x1]
    %v262 = vstv %s254
    %v263 = vmul.f32 %v258, %v262
    %v264 = vstv %s255
    %v265 = vmul.f32 %v261, %v264
    %v266 = vadd.f32 %v263, %v265
    %v267 = vmul.f32 %v258, %v264
    %v268 = vmul.f32 %v261, %v262
    %v269 = vsub.f32 %v267, %v268
    %v270 = vsub.f32 %v266, 1.0
    %v271 = vstv %s253
    %vm272 = vcmp.eq.s32.totalorder %v41, %v271
    %v273 = vmul.f32 %v270, 0.5
    %v274 = vmul.f32 %v273, %v270
    %v275 = vmul.f32 %v269, 1.5
    %v276 = vmul.f32 %v275, %v269
    %v277 = vadd.f32 %v274, %v276
    %v278 = vstv %s256
    %v279 = vmul.f32 %v278, %v277
    %v280 = vsel %vm272, %v279, 0.0
    %v281 = vadd.f32 %v251, %v280
    %vm282 = vcmask 122880
    %v283 = vsel %vm282, %v281, 0.0
    %284 = vadd.xlane.f32.xlu0 %v283
    %v285 = vpop.xlane.xlu0 %284
    %v286 = vrot.slane %v285, 4
    %v287 = vadd.f32 %v285, %v286
    %v288 = vrot.slane %v287, 2
    %v289 = vadd.f32 %v287, %v288
    %v290 = vrot.slane %v289, 1
    %v291 = vadd.f32 %v289, %v290
    %s292 = vtos %v291
    %s293 = scalar_lea.smem [#allocation7], 0
    %294 = sst [smem:[%s293]] %s292
    // Predicated region
    $region22: #{tpu_custom_call.1} parent=1 // pred_check
      _
    $region23: #{tpu_custom_call.1} parent=1 // pred_check_branch
      %296 = sbr.rel (0) target = $region25
    $region24: #{tpu_custom_call.1} parent=1 // pred_region
      %s298 = ssub.s32 16, 16
      %299 = vsyncadd [#allocation3], %s298
      %302 = dma.smem_to_hbm [#allocation7], 16, %s3, [#allocation3]
    $region25: #{tpu_custom_call.1} parent=1 // pred_fallthru
      _
    // Predicated region
    $region26: #{tpu_custom_call.1} parent=1 // pred_check
      _
    $region27: #{tpu_custom_call.1} parent=1 // pred_check_branch
      %304 = sbr.rel (0) target = $region29
    $region28: #{tpu_custom_call.1} parent=1 // pred_region
      %305 = dma.done [#allocation3], 16
    $region29: #{tpu_custom_call.1} parent=1 // pred_fallthru
      _
    %306 = sfence
    %307 = vsyncpa [#allocation3], 1
    %308 = vsyncpa [#allocation4], 1
    %309 = vsyncpa [#allocation6], 1

</llo_original>
